<compile_context>
chip_gen: v7x
topology: tpu7x:2x2x1
jax: 0.10.0
libtpu: 0.0.40
codegen_flags: <defaults>
</compile_context>

<pallas_src>
import functools

import jax
import jax.numpy as jnp
from jax.experimental import pallas as pl
from jax.experimental.pallas import tpu as pltpu

C_IN, C_OUT, K, STRIDE, PAD, DIL = 3, 8, 2, 2, 3, 2
LANE = 128
TILE_M = 512            # lanes (flattened output positions) per grid step


def _conv_tap_kernel(tile_m, w2, w_ref, b_ref, xa_ref, xb_ref, o_ref):
    # w_ref : (K*K, C_OUT, C_IN) f32  resident; tap t = kh*K + kw
    # b_ref : (C_OUT, 1)         f32  resident; bias - 0.17 already folded in
    # xa_ref: (1, C_IN, tile_m)  bf16 current tile of the flattened decimated map
    # xb_ref: (1, C_IN, 128)     bf16 halo = first 128 lanes of the next tile
    # o_ref : (1, C_OUT, tile_m) f32  lane-dense output tile
    xa = xa_ref[0].astype(jnp.float32)                      # (C_IN, tile_m)
    xb = xb_ref[0].astype(jnp.float32)                      # (C_IN, 128)
    win = jnp.concatenate([xa, xb], axis=1)                 # (C_IN, tile_m+128)

    offsets = (0, 1, w2, w2 + 1)                            # (kh,kw) -> kh*W2 + kw
    acc = jnp.zeros((C_OUT, tile_m), jnp.float32)
    for t, off in enumerate(offsets):                       # 4 static taps
        x_t = win[:, off:off + tile_m]                      # static lane shift
        acc += jnp.dot(w_ref[t], x_t, preferred_element_type=jnp.float32)

    o_ref[0] = jnp.maximum(acc + b_ref[...], 0.0)           # relu(conv + (bias-0.17))


@jax.jit
def conv_sub_relu(x, weight, bias):
    N, C, H, W = x.shape
    assert C == C_IN
    Hout = (H + 2 * PAD - DIL * (K - 1) - 1) // STRIDE + 1
    Wout = (W + 2 * PAD - DIL * (K - 1) - 1) // STRIDE + 1
    W2 = Wout + 1                       # one garbage column per row keeps kw-taps in-row
    assert W2 + 1 <= LANE, "128-lane halo requires Wout <= 126"
    assert TILE_M % LANE == 0

    # stride-2 / dilation-2 conv only reads even rows/cols of the padded input:
    # decimate once; the conv becomes a dense 2x2, stride-1 conv on xe.
    xp = jnp.pad(x, ((0, 0), (0, 0), (PAD, PAD), (PAD, PAD)))
    xe = xp[:, :, ::STRIDE, ::STRIDE]                       # (N, C, Hout+1, W2)
    xs = xe[:, :, :Hout + 1, :W2]

    L_valid = Hout * W2                                     # flattened output length
    n_tiles = (L_valid + TILE_M - 1) // TILE_M
    L_out = n_tiles * TILE_M
    L_in = (n_tiles + 1) * TILE_M                           # +1 tile so the halo block always exists

    xflat = xs.reshape(N, C_IN, (Hout + 1) * W2).astype(jnp.bfloat16)
    xflat = jnp.pad(xflat, ((0, 0), (0, 0), (0, L_in - (Hout + 1) * W2)))

    # taps ordered (kh,kw) = (0,0),(0,1),(1,0),(1,1) -> flat offsets 0, 1, W2, W2+1
    w_taps = jnp.transpose(weight, (2, 3, 0, 1)).reshape(K * K, C_OUT, C_IN)
    w_taps = w_taps.astype(jnp.float32)
    b2 = (bias.astype(jnp.float32) - 0.17).reshape(C_OUT, 1)   # fold the "- 0.17"

    kernel = functools.partial(_conv_tap_kernel, TILE_M, W2)
    hb = TILE_M // LANE                                     # halo block-index scale

    out = pl.pallas_call(
        kernel,
        out_shape=jax.ShapeDtypeStruct((N, C_OUT, L_out), jnp.float32),
        grid=(N, n_tiles),
        in_specs=[
            pl.BlockSpec((K * K, C_OUT, C_IN), lambda n, i: (0, 0, 0)),    # weights, resident
            pl.BlockSpec((C_OUT, 1), lambda n, i: (0, 0)),                 # bias,    resident
            pl.BlockSpec((1, C_IN, TILE_M), lambda n, i: (n, 0, i)),       # x tile
            pl.BlockSpec((1, C_IN, LANE), lambda n, i: (n, 0, (i + 1) * hb)),  # 128-lane halo
        ],
        out_specs=pl.BlockSpec((1, C_OUT, TILE_M), lambda n, i: (n, 0, i)),
        compiler_params=pltpu.CompilerParams(
            dimension_semantics=("parallel", "parallel")),
        cost_estimate=pl.CostEstimate(
            flops=2 * N * C_OUT * (C_IN * K * K) * Hout * Wout,
            bytes_accessed=N * (C_IN * L_in * 2 + C_OUT * L_out * 4),
            transcendentals=0),
    )(w_taps, b2, xflat, xflat)

    # drop lane padding, un-flatten, drop the per-row garbage column -> NCHW directly
    out = out[:, :, :L_valid].reshape(N, C_OUT, Hout, W2)[:, :, :, :Wout]
    return out


if __name__ == "__main__":
    key = jax.random.PRNGKey(0)
    kx, kw, kb = jax.random.split(key, 3)

    # Shapes from the module spec: x1 = randn(1, 3, 128, 64).
    x = jax.random.normal(kx, (1, C_IN, 128, 64), dtype=jnp.float32)
    weight = jax.random.normal(kw, (C_OUT, C_IN, K, K), dtype=jnp.float32) * 0.1
    bias = jax.random.normal(kb, (C_OUT,), dtype=jnp.float32) * 0.1

    y = jax.block_until_ready(conv_sub_relu(x, weight, bias))

    # Pure-JAX f32 reference for sanity (kernel reads bf16 activations -> looser tol).
    ref = jax.lax.conv_general_dilated(
        x, weight, window_strides=(STRIDE, STRIDE),
        padding=((PAD, PAD), (PAD, PAD)),
        rhs_dilation=(DIL, DIL),
        dimension_numbers=("NCHW", "OIHW", "NCHW"))
    ref = jnp.maximum(ref + bias.reshape(1, -1, 1, 1) - 0.17, 0.0)

    assert y.shape == ref.shape, (y.shape, ref.shape)
    assert jnp.allclose(y, ref, atol=2e-2, rtol=2e-2), float(jnp.max(jnp.abs(y - ref)))
    print("KERNEL_OK")
</pallas_src>

<mosaic_0001>
module attributes {stable_mosaic.version = 11 : i64} {
  func.func @_conv_tap_kernel(%arg0: i32, %arg1: i32, %arg2: memref<4x8x3xf32, #tpu.memory_space<vmem>>, %arg3: memref<8x1xf32, #tpu.memory_space<vmem>>, %arg4: memref<1x3x512xbf16, #tpu.memory_space<vmem>>, %arg5: memref<1x3x128xbf16, #tpu.memory_space<vmem>>, %arg6: memref<1x8x512xf32, #tpu.memory_space<vmem>>) attributes {dimension_semantics = [#tpu.dimension_semantics<parallel>, #tpu.dimension_semantics<parallel>], iteration_bounds = array<i64: 1, 5>, scalar_prefetch = 0 : i64, scratch_operands = 0 : i64, tpu.core_type = #tpu.core_type<tc>, window_params = [{pipeline_mode = #tpu.pipeline_mode<synchronous>, transform_indices = @transform_0, window_bounds = array<i64: 4, 8, 3>}, {pipeline_mode = #tpu.pipeline_mode<synchronous>, transform_indices = @transform_1, window_bounds = array<i64: 8, 1>}, {transform_indices = @transform_2, window_bounds = array<i64: 1, 3, 512>}, {transform_indices = @transform_3, window_bounds = array<i64: 1, 3, 128>}, {transform_indices = @transform_4, window_bounds = array<i64: 1, 8, 512>}]} {
    %c0 = arith.constant 0 : index
    %c0_0 = arith.constant 0 : index
    %c0_1 = arith.constant 0 : index
    %0 = vector.load %arg4[%c0, %c0_0, %c0_1] : memref<1x3x512xbf16, #tpu.memory_space<vmem>>, vector<1x3x512xbf16>
    %1 = vector.shape_cast %0 : vector<1x3x512xbf16> to vector<3x512xbf16>
    %2 = arith.extf %1 : vector<3x512xbf16> to vector<3x512xf32>
    %c0_2 = arith.constant 0 : index
    %c0_3 = arith.constant 0 : index
    %c0_4 = arith.constant 0 : index
    %3 = vector.load %arg5[%c0_2, %c0_3, %c0_4] : memref<1x3x128xbf16, #tpu.memory_space<vmem>>, vector<1x3x128xbf16>
    %4 = vector.shape_cast %3 : vector<1x3x128xbf16> to vector<3x128xbf16>
    %5 = arith.extf %4 : vector<3x128xbf16> to vector<3x128xf32>
    %6 = tpu.concatenate %2, %5 in 1 : vector<3x512xf32>, vector<3x128xf32> -> vector<3x640xf32>
    %cst = arith.constant 0.000000e+00 : f32
    %7 = vector.broadcast %cst : f32 to vector<8x512xf32>
    %8 = vector.extract_strided_slice %6 {offsets = [0, 0], sizes = [3, 512], strides = [1, 1]} : vector<3x640xf32> to vector<3x512xf32>
    %c0_5 = arith.constant 0 : index
    %c0_6 = arith.constant 0 : index
    %c0_7 = arith.constant 0 : index
    %9 = vector.load %arg2[%c0_5, %c0_6, %c0_7] : memref<4x8x3xf32, #tpu.memory_space<vmem>>, vector<1x8x3xf32>
    %10 = vector.shape_cast %9 : vector<1x8x3xf32> to vector<8x3xf32>
    %cst_8 = arith.constant dense<0.000000e+00> : vector<8x512xf32>
    %11 = tpu.matmul %10, %8, %cst_8 {dimension_numbers = #tpu.dot_dimension_numbers<[1], [0], [0], [1], [0, 0, 1, 1], [], []>} : vector<8x3xf32>, vector<3x512xf32>, vector<8x512xf32> -> vector<8x512xf32>
    %12 = arith.addf %7, %11 : vector<8x512xf32>
    %13 = vector.extract_strided_slice %6 {offsets = [0, 1], sizes = [3, 512], strides = [1, 1]} : vector<3x640xf32> to vector<3x512xf32>
    %c1 = arith.constant 1 : index
    %c0_9 = arith.constant 0 : index
    %c0_10 = arith.constant 0 : index
    %14 = vector.load %arg2[%c1, %c0_9, %c0_10] : memref<4x8x3xf32, #tpu.memory_space<vmem>>, vector<1x8x3xf32>
    %15 = vector.shape_cast %14 : vector<1x8x3xf32> to vector<8x3xf32>
    %cst_11 = arith.constant dense<0.000000e+00> : vector<8x512xf32>
    %16 = tpu.matmul %15, %13, %cst_11 {dimension_numbers = #tpu.dot_dimension_numbers<[1], [0], [0], [1], [0, 0, 1, 1], [], []>} : vector<8x3xf32>, vector<3x512xf32>, vector<8x512xf32> -> vector<8x512xf32>
    %17 = arith.addf %12, %16 : vector<8x512xf32>
    %18 = vector.extract_strided_slice %6 {offsets = [0, 35], sizes = [3, 512], strides = [1, 1]} : vector<3x640xf32> to vector<3x512xf32>
    %c2 = arith.constant 2 : index
    %c0_12 = arith.constant 0 : index
    %c0_13 = arith.constant 0 : index
    %19 = vector.load %arg2[%c2, %c0_12, %c0_13] : memref<4x8x3xf32, #tpu.memory_space<vmem>>, vector<1x8x3xf32>
    %20 = vector.shape_cast %19 : vector<1x8x3xf32> to vector<8x3xf32>
    %cst_14 = arith.constant dense<0.000000e+00> : vector<8x512xf32>
    %21 = tpu.matmul %20, %18, %cst_14 {dimension_numbers = #tpu.dot_dimension_numbers<[1], [0], [0], [1], [0, 0, 1, 1], [], []>} : vector<8x3xf32>, vector<3x512xf32>, vector<8x512xf32> -> vector<8x512xf32>
    %22 = arith.addf %17, %21 : vector<8x512xf32>
    %23 = vector.extract_strided_slice %6 {offsets = [0, 36], sizes = [3, 512], strides = [1, 1]} : vector<3x640xf32> to vector<3x512xf32>
    %c3 = arith.constant 3 : index
    %c0_15 = arith.constant 0 : index
    %c0_16 = arith.constant 0 : index
    %24 = vector.load %arg2[%c3, %c0_15, %c0_16] : memref<4x8x3xf32, #tpu.memory_space<vmem>>, vector<1x8x3xf32>
    %25 = vector.shape_cast %24 : vector<1x8x3xf32> to vector<8x3xf32>
    %cst_17 = arith.constant dense<0.000000e+00> : vector<8x512xf32>
    %26 = tpu.matmul %25, %23, %cst_17 {dimension_numbers = #tpu.dot_dimension_numbers<[1], [0], [0], [1], [0, 0, 1, 1], [], []>} : vector<8x3xf32>, vector<3x512xf32>, vector<8x512xf32> -> vector<8x512xf32>
    %27 = arith.addf %22, %26 : vector<8x512xf32>
    %c0_18 = arith.constant 0 : index
    %c0_19 = arith.constant 0 : index
    %28 = vector.load %arg3[%c0_18, %c0_19] : memref<8x1xf32, #tpu.memory_space<vmem>>, vector<8x1xf32>
    %29 = vector.broadcast %28 : vector<8x1xf32> to vector<8x512xf32>
    %30 = arith.addf %27, %29 : vector<8x512xf32>
    %cst_20 = arith.constant 0.000000e+00 : f32
    %31 = vector.broadcast %cst_20 : f32 to vector<8x512xf32>
    %32 = arith.maximumf %30, %31 : vector<8x512xf32>
    %c0_21 = arith.constant 0 : index
    %c0_22 = arith.constant 0 : index
    %c0_23 = arith.constant 0 : index
    %33 = vector.load %arg6[%c0_21, %c0_22, %c0_23] : memref<1x8x512xf32, #tpu.memory_space<vmem>>, vector<1x8x512xf32>
    %34 = vector.shape_cast %33 : vector<1x8x512xf32> to vector<8x512xf32>
    %35 = vector.shape_cast %32 : vector<8x512xf32> to vector<1x8x512xf32>
    tpu.vector_store %arg6[%c0_21, %c0_22, %c0_23], %35 {strides = array<i32>} : memref<1x8x512xf32, #tpu.memory_space<vmem>>, vector<1x8x512xf32>,
    return
  }
  func.func @transform_0(%arg0: i32, %arg1: i32) -> (i32, i32, i32) {
    %c0_i32 = arith.constant 0 : i32
    %c0_i32_0 = arith.constant 0 : i32
    %c0_i32_1 = arith.constant 0 : i32
    %c0_i32_2 = arith.constant 0 : i32
    return %c0_i32, %c0_i32_0, %c0_i32_1 : i32, i32, i32
  }
  func.func @transform_1(%arg0: i32, %arg1: i32) -> (i32, i32) {
    %c0_i32 = arith.constant 0 : i32
    %c0_i32_0 = arith.constant 0 : i32
    %c0_i32_1 = arith.constant 0 : i32
    return %c0_i32, %c0_i32_0 : i32, i32
  }
  func.func @transform_2(%arg0: i32, %arg1: i32) -> (i32, i32, i32) {
    %c0_i32 = arith.constant 0 : i32
    %c0_i32_0 = arith.constant 0 : i32
    return %arg0, %c0_i32, %arg1 : i32, i32, i32
  }
  func.func @transform_3(%arg0: i32, %arg1: i32) -> (i32, i32, i32) {
    %c1_i32 = arith.constant 1 : i32
    %0 = arith.addi %arg1, %c1_i32 : i32
    %c4_i32 = arith.constant 4 : i32
    %1 = arith.muli %0, %c4_i32 : i32
    %c0_i32 = arith.constant 0 : i32
    %c0_i32_0 = arith.constant 0 : i32
    return %arg0, %c0_i32, %1 : i32, i32, i32
  }
  func.func @transform_4(%arg0: i32, %arg1: i32) -> (i32, i32, i32) {
    %c0_i32 = arith.constant 0 : i32
    %c0_i32_0 = arith.constant 0 : i32
    return %arg0, %c0_i32, %arg1 : i32, i32, i32
  }
}

</mosaic_0001>

<llo_original>
// kernel: conv_sub_relu.1
$region0: #{conv_sub_relu.1}
  #allocation0 [shape = 'u32[]', space=smem, size = 0x4, offset = 0x4, fixed_abs, tag = 'smem constant byte address 0x4 - core index']
  #allocation1 [shape = 'u32[144,128]{1,0:T(1,128)}', space=vmem, size = 0x12000, scoped, tag = 'internal scratch']
  %s0 = inlined_call_operand.vmem [shape: f32[4,8,3], index: 0, kind: input, shape index: {}]
  %s1 = inlined_call_operand.vmem [shape: f32[8,1], index: 1, kind: input, shape index: {}]
  %s2 = inlined_call_operand.vmem [shape: bf16[1,3,3072], index: 2, kind: input, shape index: {}, may-alias: {2,3}]
  %s3 = inlined_call_operand.vmem [shape: bf16[1,3,3072], index: 3, kind: input, shape index: {}, may-alias: {2,3}]
  %s4 = inlined_call_operand.vmem [shape: f32[1,8,2560], index: 4, kind: output, shape index: {}]
  %s5 = sld [smem:[#allocation0]]
  $region49: #{conv_sub_relu.1} parent=0
    _
  %s7 = ssub.s32 1, %s5
  %s8 = scalar_select 0, %s7, %s5
  loop: start=0, step=1, limit=7
  $region2: #{conv_sub_relu.1} parent=0 // loop_pre_header
    _
  $region3: #{conv_sub_relu.1} parent=0 // loop_header
    %s10 = sphi 0, %s14
    %p11 = scmp.ge.s32.totalorder %s10, 7
    %s17 = sphi 0, %s29
    %s18 = sphi 0, %s25
    %s19 = sphi 0, %s17
    %s20 = sphi 0, %s18
    %s21 = sphi 0, %s19
    %s22 = sphi 0, %s20
    %s30 = sphi 0, %s30
    %s32 = sphi 0, %s30
    %s33 = sphi 0, %s32
    %s47 = sphi 0, %s33
    %s51 = sphi 0, %s51
    %s53 = sphi 0, %s51
    %s54 = sphi 0, %s53
    %s68 = sphi 0, %s54
    %s76 = sphi 0, %s78
    %s79 = sphi 0, %s76
    %s80 = sphi 0, %s79
    %s96 = sphi 0, %s80
    %s108 = sphi 0, %s110
    %s111 = sphi 0, %s108
    %s112 = sphi 0, %s111
    %s128 = sphi 0, %s112
    %s136 = sphi 0, %s138
    %s139 = sphi 0, %s136
    %s140 = sphi 0, %s139
    %s156 = sphi 0, %s140
  $region4: #{conv_sub_relu.1} parent=0 // loop_header_branch
    %13 = sbr.rel (%p11) target = $region8
  $region5: #{conv_sub_relu.1} parent=0 // loop_body
    %s15 = ssub.s32 %s10, 1
    %s16 = ssub.s32 %s10, 2
    %s23 = sadd.s32 1, %s18
    %p24 = scmp.ge.s32.totalorder %s23, 5
    %s25 = scalar_select %p24, 0, %s23
    %s26 = sadd.s32 1, %s17
    %s27 = scalar_select %p24, %s26, %s17
    %p28 = scmp.ge.s32.totalorder %s27, 1
    %s29 = scalar_select %p28, 0, %s27
    %s31 = sadd.s32 %s30, 1
    %p34 = scmp.eq.s32.totalorder %s10, 4
    %p35 = scmp.ne.s32.totalorder %s30, %s32
    %p36 = scmp.eq.s32.totalorder %s10, 0
    %p37 = por %p35, %p36
    %p38 = scmp.ne.s32.totalorder %s30, %s32
    %p39 = scmp.eq.s32.totalorder %s15, 4
    %p40 = por %p38, %p39
    %p41 = scmp.ne.s32.totalorder %s32, %s33
    %p42 = scmp.eq.s32.totalorder %s15, 0
    %p43 = por %p41, %p42
    %p44 = scmp.ne.s32.totalorder %s32, %s33
    %p45 = scmp.eq.s32.totalorder %s16, 4
    %p46 = por %p44, %p45
    %p48 = scmp.ne.s32.totalorder %s33, %s47
    %p49 = scmp.eq.s32.totalorder %s16, 0
    %p50 = por %p48, %p49
    %s52 = sadd.s32 %s51, 1
    %p55 = scmp.eq.s32.totalorder %s10, 4
    %p56 = scmp.ne.s32.totalorder %s51, %s53
    %p57 = scmp.eq.s32.totalorder %s10, 0
    %p58 = por %p56, %p57
    %p59 = scmp.ne.s32.totalorder %s51, %s53
    %p60 = scmp.eq.s32.totalorder %s15, 4
    %p61 = por %p59, %p60
    %p62 = scmp.ne.s32.totalorder %s53, %s54
    %p63 = scmp.eq.s32.totalorder %s15, 0
    %p64 = por %p62, %p63
    %p65 = scmp.ne.s32.totalorder %s53, %s54
    %p66 = scmp.eq.s32.totalorder %s16, 4
    %p67 = por %p65, %p66
    %p69 = scmp.ne.s32.totalorder %s54, %s68
    %p70 = scmp.eq.s32.totalorder %s16, 0
    %p71 = por %p69, %p70
    %s72 = ssub.s32 %s17, %s29
    %s73 = ssub.s32 %s18, %s25
    %s74 = sor.u32 %s72, %s73
    %p75 = scmp.eq.s32.totalorder %s74, 0
    %s77 = sadd.s32 %s76, 1
    %s78 = scalar_select %p75, %s76, %s77
    %p81 = pneg %p75
    %p82 = scmp.eq.s32.totalorder %s10, 4
    %p83 = por %p81, %p82
    %p84 = scmp.ne.s32.totalorder %s76, %s79
    %p85 = scmp.eq.s32.totalorder %s10, 0
    %p86 = por %p84, %p85
    %p87 = scmp.ne.s32.totalorder %s76, %s79
    %p88 = scmp.eq.s32.totalorder %s15, 4
    %p89 = por %p87, %p88
    %p90 = scmp.ne.s32.totalorder %s79, %s80
    %p91 = scmp.eq.s32.totalorder %s15, 0
    %p92 = por %p90, %p91
    %p93 = scmp.ne.s32.totalorder %s79, %s80
    %p94 = scmp.eq.s32.totalorder %s16, 4
    %p95 = por %p93, %p94
    %p97 = scmp.ne.s32.totalorder %s80, %s96
    %p98 = scmp.eq.s32.totalorder %s16, 0
    %p99 = por %p97, %p98
    %s100 = sadd.s32 %s18, 1
    %s101 = smul.u32 %s100, 4
    %s102 = sadd.s32 %s25, 1
    %s103 = smul.u32 %s102, 4
    %s104 = ssub.s32 %s17, %s29
    %s105 = ssub.s32 %s101, %s103
    %s106 = sor.u32 %s104, %s105
    %p107 = scmp.eq.s32.totalorder %s106, 0
    %s109 = sadd.s32 %s108, 1
    %s110 = scalar_select %p107, %s108, %s109
    %p113 = pneg %p107
    %p114 = scmp.eq.s32.totalorder %s10, 4
    %p115 = por %p113, %p114
    %p116 = scmp.ne.s32.totalorder %s108, %s111
    %p117 = scmp.eq.s32.totalorder %s10, 0
    %p118 = por %p116, %p117
    %p119 = scmp.ne.s32.totalorder %s108, %s111
    %p120 = scmp.eq.s32.totalorder %s15, 4
    %p121 = por %p119, %p120
    %p122 = scmp.ne.s32.totalorder %s111, %s112
    %p123 = scmp.eq.s32.totalorder %s15, 0
    %p124 = por %p122, %p123
    %p125 = scmp.ne.s32.totalorder %s111, %s112
    %p126 = scmp.eq.s32.totalorder %s16, 4
    %p127 = por %p125, %p126
    %p129 = scmp.ne.s32.totalorder %s112, %s128
    %p130 = scmp.eq.s32.totalorder %s16, 0
    %p131 = por %p129, %p130
    %s132 = ssub.s32 %s17, %s29
    %s133 = ssub.s32 %s18, %s25
    %s134 = sor.u32 %s132, %s133
    %p135 = scmp.eq.s32.totalorder %s134, 0
    %s137 = sadd.s32 %s136, 1
    %s138 = scalar_select %p135, %s136, %s137
    %p141 = pneg %p135
    %p142 = scmp.eq.s32.totalorder %s10, 4
    %p143 = por %p141, %p142
    %p144 = scmp.ne.s32.totalorder %s136, %s139
    %p145 = scmp.eq.s32.totalorder %s10, 0
    %p146 = por %p144, %p145
    %p147 = scmp.ne.s32.totalorder %s136, %s139
    %p148 = scmp.eq.s32.totalorder %s15, 4
    %p149 = por %p147, %p148
    %p150 = scmp.ne.s32.totalorder %s139, %s140
    %p151 = scmp.eq.s32.totalorder %s15, 0
    %p152 = por %p150, %p151
    %p153 = scmp.ne.s32.totalorder %s139, %s140
    %p154 = scmp.eq.s32.totalorder %s16, 4
    %p155 = por %p153, %p154
    %p157 = scmp.ne.s32.totalorder %s140, %s156
    %p158 = scmp.eq.s32.totalorder %s16, 0
    %p159 = por %p157, %p158
    %p160 = scmp.le.s32.totalorder 1, %s10
    %p161 = scmp.lt.s32.totalorder %s10, 6
    %p162 = pnand %p160, %p161
    %p163 = pneg %p162
    // Predicated region
    $region9: #{conv_sub_relu.1} parent=5 // pred_check
      _
    $region10: #{conv_sub_relu.1} parent=5 // pred_check_branch
      %165 = sbr.rel (%p162) target = $region12
    $region11: #{conv_sub_relu.1} parent=5 // pred_region
      %s166 = ssub.s32 %s10, 1
      // Predicated region
      $region13: #{conv_sub_relu.1} parent=11 // pred_check
        %p167 = pneg %p43
      $region14: #{conv_sub_relu.1} parent=11 // pred_check_branch
        %169 = sbr.rel (%p167) target = $region16
      $region15: #{conv_sub_relu.1} parent=11 // pred_region
        _
      $region16: #{conv_sub_relu.1} parent=11 // pred_fallthru
        _
      // Predicated region
      $region17: #{conv_sub_relu.1} parent=11 // pred_check
        %p170 = pneg %p64
      $region18: #{conv_sub_relu.1} parent=11 // pred_check_branch
        %172 = sbr.rel (%p170) target = $region20
      $region19: #{conv_sub_relu.1} parent=11 // pred_region
        _
      $region20: #{conv_sub_relu.1} parent=11 // pred_fallthru
        _
    $region12: #{conv_sub_relu.1} parent=5 // pred_fallthru
      _
    %p173 = scmp.lt.s32.totalorder %s10, 5
    // Predicated region
    $region21: #{conv_sub_relu.1} parent=5 // pred_check
      %p174 = pneg %p173
    $region22: #{conv_sub_relu.1} parent=5 // pred_check_branch
      %176 = sbr.rel (%p174) target = $region24
    $region23: #{conv_sub_relu.1} parent=5 // pred_region
      // Predicated region
      $region25: #{conv_sub_relu.1} parent=23 // pred_check
        %p177 = pneg %p86
      $region26: #{conv_sub_relu.1} parent=23 // pred_check_branch
        %179 = sbr.rel (%p177) target = $region28
      $region27: #{conv_sub_relu.1} parent=23 // pred_region
        %s180 = smul.u32 4, %s18
        %p181 = scmp.lt.s32.totalorder %s17, 0
        %s182 = scalar_select %p181, %s17, 0
        %p183 = scmp.lt.s32.totalorder %s180, 23
        %s184 = scalar_select %p183, %s180, 23
        %s185 = smul.addr %s182, 24
        %s186 = sadd.s32 %s184, %s185
        %s187 = smul.addr %s186, 2
        %s188 = scalar_lea.vmem %s2, %s187
        %s189 = smul.u32 4, %s18
      $region28: #{conv_sub_relu.1} parent=23 // pred_fallthru
        _
      // Predicated region
      $region29: #{conv_sub_relu.1} parent=23 // pred_check
        %p190 = pneg %p118
      $region30: #{conv_sub_relu.1} parent=23 // pred_check_branch
        %192 = sbr.rel (%p190) target = $region32
      $region31: #{conv_sub_relu.1} parent=23 // pred_region
        %s193 = sadd.s32 %s18, 1
        %s194 = smul.u32 %s193, 4
        %p195 = scmp.lt.s32.totalorder %s17, 0
        %s196 = scalar_select %p195, %s17, 0
        %p197 = scmp.lt.s32.totalorder %s194, 23
        %s198 = scalar_select %p197, %s194, 23
        %s199 = smul.addr %s196, 24
        %s200 = sadd.s32 %s198, %s199
        %s201 = smul.addr %s200, 2
        %s202 = scalar_lea.vmem %s3, %s201
        %s203 = sadd.s32 %s18, 1
        %s204 = smul.u32 %s203, 4
      $region32: #{conv_sub_relu.1} parent=23 // pred_fallthru
        _
    $region24: #{conv_sub_relu.1} parent=5 // pred_fallthru
      _
    %p205 = scmp.le.s32.totalorder 1, %s10
    %p206 = scmp.lt.s32.totalorder %s10, 6
    %p207 = pnand %p205, %p206
    %p208 = pneg %p207
    // Predicated region
    $region33: #{conv_sub_relu.1} parent=5 // pred_check
      _
    $region34: #{conv_sub_relu.1} parent=5 // pred_check_branch
      %210 = sbr.rel (%p207) target = $region36
    $region35: #{conv_sub_relu.1} parent=5 // pred_region
      %s211 = ssub.s32 %s10, 1
      %p212 = pneg %p43
      %p213 = pneg %p40
      %p214 = pneg %p64
      %p215 = pneg %p61
      %s216 = smul.u32 4, %s20
      %p217 = scmp.lt.s32.totalorder %s19, 0
      %s218 = scalar_select %p217, %s19, 0
      %p219 = scmp.lt.s32.totalorder %s216, 23
      %s220 = scalar_select %p219, %s216, 23
      %s221 = smul.addr %s218, 24
      %s222 = sadd.s32 %s220, %s221
      %s223 = smul.addr %s222, 2
      %s224 = scalar_lea.vmem %s2, %s223
      %p225 = pneg %p92
      %p226 = pneg %p89
      %s227 = sadd.s32 %s20, 1
      %s228 = smul.u32 %s227, 4
      %p229 = scmp.lt.s32.totalorder %s19, 0
      %s230 = scalar_select %p229, %s19, 0
      %p231 = scmp.lt.s32.totalorder %s228, 23
      %s232 = scalar_select %p231, %s228, 23
      %s233 = smul.addr %s230, 24
      %s234 = sadd.s32 %s232, %s233
      %s235 = smul.addr %s234, 2
      %s236 = scalar_lea.vmem %s3, %s235
      %p237 = pneg %p124
      %p238 = pneg %p121
      %p239 = pneg %p152
      %p240 = pneg %p149
      %s241 = smul.u32 4, %s20
      %p242 = scmp.lt.s32.totalorder %s19, 0
      %s243 = scalar_select %p242, %s19, 0
      %p244 = scmp.lt.s32.totalorder %s241, 19
      %s245 = scalar_select %p244, %s241, 19
      %s246 = smul.addr %s243, 20
      %s247 = sadd.s32 %s245, %s246
      %s248 = smul.addr %s247, 8
      %s249 = scalar_lea.vmem %s4, %s248
      %s250 = smul.u32 4, %s20
      %p251 = scmp.lt.s32.totalorder %s19, 0
      %s252 = scalar_select %p251, %s19, 0
      %p253 = scmp.lt.s32.totalorder %s250, 23
      %s254 = scalar_select %p253, %s250, 23
      %s255 = smul.addr %s252, 24
      %s256 = sadd.s32 %s254, %s255
      %s257 = smul.addr %s256, 2
      %s258 = scalar_lea.vmem %s2, %s257
      %s259 = smul.u32 4, %s20
      %s260 = sadd.s32 %s20, 1
      %s261 = smul.u32 %s260, 4
      %p262 = scmp.lt.s32.totalorder %s19, 0
      %s263 = scalar_select %p262, %s19, 0
      %p264 = scmp.lt.s32.totalorder %s261, 23
      %s265 = scalar_select %p264, %s261, 23
      %s266 = smul.addr %s263, 24
      %s267 = sadd.s32 %s265, %s266
      %s268 = smul.addr %s267, 2
      %s269 = scalar_lea.vmem %s3, %s268
      %s270 = sadd.s32 %s20, 1
      %s271 = smul.u32 %s270, 4
      %s272 = smul.u32 4, %s20
      %p273 = scmp.lt.s32.totalorder %s19, 0
      %s274 = scalar_select %p273, %s19, 0
      %p275 = scmp.lt.s32.totalorder %s272, 19
      %s276 = scalar_select %p275, %s272, 19
      %s277 = smul.addr %s274, 20
      %s278 = sadd.s32 %s276, %s277
      %s279 = smul.addr %s278, 8
      %s280 = scalar_lea.vmem %s4, %s279
      %s281 = smul.u32 4, %s20
      %v282 = vld [vmem:[%s258] sm:$0xff]
      %v283 = vunpack.c.l.bf16 %v282
      %v284 = vunpack.c.h.bf16 %v282
      %v285 = vld [vmem:[%s269] sm:$0x3]
      %v286 = vunpack.c.l.bf16 %v285
      %v289 = vcombine.high %v283, %v283
      %v290 = vcombine.high %v284, %v284
      %v291 = vld [vmem:[%s0] sm:$0xff]
      %s292 = scalar_lea.vmem %s0, 8
      %v293 = vld [vmem:[%s292] sm:$0xff]
      %295 = vrot.lane.b32.xlu0 %v283, 127
      %v296 = vpop.permute.xlu0 %295
      %297 = vrot.lane.b32.xlu0 %v289, 127
      %v298 = vpop.permute.xlu0 %297
      %299 = vrot.lane.b32.xlu0 %v284, 127
      %v300 = vpop.permute.xlu0 %299
      %301 = vrot.lane.b32.xlu0 %v290, 127
      %v302 = vpop.permute.xlu0 %301
      %303 = vrot.lane.b32.xlu0 %v286, 127
      %v304 = vpop.permute.xlu0 %303
      %vm305 = vcmask 1039360
      %v306 = vsel %vm305, %v296, %v298
      %v307 = vsel %vm305, %v298, %v300
      %v308 = vsel %vm305, %v300, %v302
      %v309 = vsel %vm305, %v302, %v304
      %vm310 = vcmask 23552
      %v312 = vsel %vm310, %v293, 0
      %vm314 = vcmask 1042432
      %v315 = vsel %vm314, %v306, 0
      %v317 = vsel %vm314, %v307, 0
      %v319 = vsel %vm314, %v308, 0
      %v321 = vsel %vm314, %v309, 0
      %323 = vmatprep.subr.mxu0 %v317
      %324 = vmatpush1.msra.mxu0 %v315
      %325 = vmatprep.subr.mxu0 0.0
      %326 = vmatpush1.msra.mxu0 0.0
      %327 = vmatprep.subr.mxu0 0.0
      %328 = vmatpush1.msra.mxu0 0.0
      %329 = vmatprep.subr.mxu0 0.0
      %330 = vmatpush1.msra.mxu0 0.0
      %331 = vmatprep.subr.mxu0 0.0
      %332 = vmatpush1.msra.mxu0 0.0
      %333 = vmatprep.subr.mxu0 0.0
      %334 = vmatpush1.msra.mxu0 0.0
      %335 = vmatprep.subr.mxu0 0.0
      %336 = vmatpush1.msra.mxu0 0.0
      %337 = vmatprep.subr.mxu0 0.0
      %338 = vmatpush1.msra.mxu0 0.0
      %339 = vmatprep.subr.mxu0 0.0
      %340 = vmatpush1.msra.mxu0 0.0
      %341 = vmatprep.subr.mxu0 0.0
      %342 = vmatpush1.msra.mxu0 0.0
      %343 = vmatprep.subr.mxu0 0.0
      %344 = vmatpush1.msra.mxu0 0.0
      %345 = vmatprep.subr.mxu0 0.0
      %346 = vmatpush1.msra.mxu0 0.0
      %347 = vmatprep.subr.mxu0 0.0
      %348 = vmatpush1.msra.mxu0 0.0
      %349 = vmatprep.subr.mxu0 0.0
      %350 = vmatpush1.msra.mxu0 0.0
      %351 = vmatprep.subr.mxu0 0.0
      %352 = vmatpush1.msra.mxu0 0.0
      %353 = vmatprep.subr.mxu0 0.0
      %354 = vmatpush1.msra.mxu0 0.0
      %355 = vmatprep.subr.mxu0 0.0
      %356 = vmatpush1.msra.mxu0 0.0
      %357 = vmatprep.subr.mxu0 0.0
      %358 = vmatpush1.msra.mxu0 0.0
      %359 = vmatprep.subr.mxu0 0.0
      %360 = vmatpush1.msra.mxu0 0.0
      %361 = vmatprep.subr.mxu0 0.0
      %362 = vmatpush1.msra.mxu0 0.0
      %363 = vmatprep.subr.mxu0 0.0
      %364 = vmatpush1.msra.mxu0 0.0
      %365 = vmatprep.subr.mxu0 0.0
      %366 = vmatpush1.msra.mxu0 0.0
      %367 = vmatprep.subr.mxu0 0.0
      %368 = vmatpush1.msra.mxu0 0.0
      %369 = vmatprep.subr.mxu0 0.0
      %370 = vmatpush1.msra.mxu0 0.0
      %371 = vmatprep.subr.mxu0 0.0
      %372 = vmatpush1.msra.mxu0 0.0
      %373 = vmatprep.subr.mxu0 0.0
      %374 = vmatpush1.msra.mxu0 0.0
      %375 = vmatprep.subr.mxu0 0.0
      %376 = vmatpush1.msra.mxu0 0.0
      %377 = vmatprep.subr.mxu0 0.0
      %378 = vmatpush1.msra.mxu0 0.0
      %379 = vmatprep.subr.mxu0 0.0
      %380 = vmatpush1.msra.mxu0 0.0
      %381 = vmatprep.subr.mxu0 0.0
      %382 = vmatpush1.msra.mxu0 0.0
      %383 = vmatprep.subr.mxu0 0.0
      %384 = vmatpush1.msra.mxu0 0.0
      %385 = vmatprep.subr.mxu0 0.0
      %386 = vmatpush1.msra.mxu0 0.0
      %387 = vmatprep.mubr.f32.mxu0 0.0
      %388 = vmatmul.mubr.f32.gmra.mrb[0].mxu0 %v312
      %v389 = vpop.f32.mrb[0].mxu0
      %v390 = vadd.f32 0.0, %v389
      %v391 = vpop.f32.mrb[0].mxu0
      %v392 = vadd.f32 0.0, %v391
      %393 = vdwg.mxu0
      %394 = vmatprep.subr.mxu0 %v321
      %395 = vmatpush1.msra.mxu0 %v319
      %396 = vmatprep.subr.mxu0 0.0
      %397 = vmatpush1.msra.mxu0 0.0
      %398 = vmatprep.subr.mxu0 0.0
      %399 = vmatpush1.msra.mxu0 0.0
      %400 = vmatprep.subr.mxu0 0.0
      %401 = vmatpush1.msra.mxu0 0.0
      %402 = vmatprep.subr.mxu0 0.0
      %403 = vmatpush1.msra.mxu0 0.0
      %404 = vmatprep.subr.mxu0 0.0
      %405 = vmatpush1.msra.mxu0 0.0
      %406 = vmatprep.subr.mxu0 0.0
      %407 = vmatpush1.msra.mxu0 0.0
      %408 = vmatprep.subr.mxu0 0.0
      %409 = vmatpush1.msra.mxu0 0.0
      %410 = vmatprep.subr.mxu0 0.0
      %411 = vmatpush1.msra.mxu0 0.0
      %412 = vmatprep.subr.mxu0 0.0
      %413 = vmatpush1.msra.mxu0 0.0
      %414 = vmatprep.subr.mxu0 0.0
      %415 = vmatpush1.msra.mxu0 0.0
      %416 = vmatprep.subr.mxu0 0.0
      %417 = vmatpush1.msra.mxu0 0.0
      %418 = vmatprep.subr.mxu0 0.0
      %419 = vmatpush1.msra.mxu0 0.0
      %420 = vmatprep.subr.mxu0 0.0
      %421 = vmatpush1.msra.mxu0 0.0
      %422 = vmatprep.subr.mxu0 0.0
      %423 = vmatpush1.msra.mxu0 0.0
      %424 = vmatprep.subr.mxu0 0.0
      %425 = vmatpush1.msra.mxu0 0.0
      %426 = vmatprep.subr.mxu0 0.0
      %427 = vmatpush1.msra.mxu0 0.0
      %428 = vmatprep.subr.mxu0 0.0
      %429 = vmatpush1.msra.mxu0 0.0
      %430 = vmatprep.subr.mxu0 0.0
      %431 = vmatpush1.msra.mxu0 0.0
      %432 = vmatprep.subr.mxu0 0.0
      %433 = vmatpush1.msra.mxu0 0.0
      %434 = vmatprep.subr.mxu0 0.0
      %435 = vmatpush1.msra.mxu0 0.0
      %436 = vmatprep.subr.mxu0 0.0
      %437 = vmatpush1.msra.mxu0 0.0
      %438 = vmatprep.subr.mxu0 0.0
      %439 = vmatpush1.msra.mxu0 0.0
      %440 = vmatprep.subr.mxu0 0.0
      %441 = vmatpush1.msra.mxu0 0.0
      %442 = vmatprep.subr.mxu0 0.0
      %443 = vmatpush1.msra.mxu0 0.0
      %444 = vmatprep.subr.mxu0 0.0
      %445 = vmatpush1.msra.mxu0 0.0
      %446 = vmatprep.subr.mxu0 0.0
      %447 = vmatpush1.msra.mxu0 0.0
      %448 = vmatprep.subr.mxu0 0.0
      %449 = vmatpush1.msra.mxu0 0.0
      %450 = vmatprep.subr.mxu0 0.0
      %451 = vmatpush1.msra.mxu0 0.0
      %452 = vmatprep.subr.mxu0 0.0
      %453 = vmatpush1.msra.mxu0 0.0
      %454 = vmatprep.subr.mxu0 0.0
      %455 = vmatpush1.msra.mxu0 0.0
      %456 = vmatprep.subr.mxu0 0.0
      %457 = vmatpush1.msra.mxu0 0.0
      %458 = vmatprep.mubr.f32.mxu0 0.0
      %459 = vmatmul.mubr.f32.gmra.mrb[0].mxu0 %v312
      %v460 = vpop.f32.mrb[0].mxu0
      %v461 = vadd.f32 0.0, %v460
      %v462 = vpop.f32.mrb[0].mxu0
      %v463 = vadd.f32 0.0, %v462
      %464 = vdwg.mxu0
      %v466 = vsel %vm310, %v291, 0
      %v468 = vsel %vm314, %v283, 0
      %v470 = vsel %vm314, %v289, 0
      %v472 = vsel %vm314, %v284, 0
      %v474 = vsel %vm314, %v290, 0
      %476 = vmatprep.subr.mxu0 %v470
      %477 = vmatpush1.msra.mxu0 %v468
      %478 = vmatprep.subr.mxu0 0.0
      %479 = vmatpush1.msra.mxu0 0.0
      %480 = vmatprep.subr.mxu0 0.0
      %481 = vmatpush1.msra.mxu0 0.0
      %482 = vmatprep.subr.mxu0 0.0
      %483 = vmatpush1.msra.mxu0 0.0
      %484 = vmatprep.subr.mxu0 0.0
      %485 = vmatpush1.msra.mxu0 0.0
      %486 = vmatprep.subr.mxu0 0.0
      %487 = vmatpush1.msra.mxu0 0.0
      %488 = vmatprep.subr.mxu0 0.0
      %489 = vmatpush1.msra.mxu0 0.0
      %490 = vmatprep.subr.mxu0 0.0
      %491 = vmatpush1.msra.mxu0 0.0
      %492 = vmatprep.subr.mxu0 0.0
      %493 = vmatpush1.msra.mxu0 0.0
      %494 = vmatprep.subr.mxu0 0.0
      %495 = vmatpush1.msra.mxu0 0.0
      %496 = vmatprep.subr.mxu0 0.0
      %497 = vmatpush1.msra.mxu0 0.0
      %498 = vmatprep.subr.mxu0 0.0
      %499 = vmatpush1.msra.mxu0 0.0
      %500 = vmatprep.subr.mxu0 0.0
      %501 = vmatpush1.msra.mxu0 0.0
      %502 = vmatprep.subr.mxu0 0.0
      %503 = vmatpush1.msra.mxu0 0.0
      %504 = vmatprep.subr.mxu0 0.0
      %505 = vmatpush1.msra.mxu0 0.0
      %506 = vmatprep.subr.mxu0 0.0
      %507 = vmatpush1.msra.mxu0 0.0
      %508 = vmatprep.subr.mxu0 0.0
      %509 = vmatpush1.msra.mxu0 0.0
      %510 = vmatprep.subr.mxu0 0.0
      %511 = vmatpush1.msra.mxu0 0.0
      %512 = vmatprep.subr.mxu0 0.0
      %513 = vmatpush1.msra.mxu0 0.0
      %514 = vmatprep.subr.mxu0 0.0
      %515 = vmatpush1.msra.mxu0 0.0
      %516 = vmatprep.subr.mxu0 0.0
      %517 = vmatpush1.msra.mxu0 0.0
      %518 = vmatprep.subr.mxu0 0.0
      %519 = vmatpush1.msra.mxu0 0.0
      %520 = vmatprep.subr.mxu0 0.0
      %521 = vmatpush1.msra.mxu0 0.0
      %522 = vmatprep.subr.mxu0 0.0
      %523 = vmatpush1.msra.mxu0 0.0
      %524 = vmatprep.subr.mxu0 0.0
      %525 = vmatpush1.msra.mxu0 0.0
      %526 = vmatprep.subr.mxu0 0.0
      %527 = vmatpush1.msra.mxu0 0.0
      %528 = vmatprep.subr.mxu0 0.0
      %529 = vmatpush1.msra.mxu0 0.0
      %530 = vmatprep.subr.mxu0 0.0
      %531 = vmatpush1.msra.mxu0 0.0
      %532 = vmatprep.subr.mxu0 0.0
      %533 = vmatpush1.msra.mxu0 0.0
      %534 = vmatprep.subr.mxu0 0.0
      %535 = vmatpush1.msra.mxu0 0.0
      %536 = vmatprep.subr.mxu0 0.0
      %537 = vmatpush1.msra.mxu0 0.0
      %538 = vmatprep.subr.mxu0 0.0
      %539 = vmatpush1.msra.mxu0 0.0
      %540 = vmatprep.mubr.f32.mxu0 0.0
      %541 = vmatmul.mubr.f32.gmra.mrb[0].mxu0 %v466
      %v542 = vpop.f32.mrb[0].mxu0
      %v543 = vadd.f32 %v390, %v542
      %v544 = vpop.f32.mrb[0].mxu0
      %v545 = vadd.f32 %v392, %v544
      %546 = vdwg.mxu0
      %547 = vmatprep.subr.mxu0 %v474
      %548 = vmatpush1.msra.mxu0 %v472
      %549 = vmatprep.subr.mxu0 0.0
      %550 = vmatpush1.msra.mxu0 0.0
      %551 = vmatprep.subr.mxu0 0.0
      %552 = vmatpush1.msra.mxu0 0.0
      %553 = vmatprep.subr.mxu0 0.0
      %554 = vmatpush1.msra.mxu0 0.0
      %555 = vmatprep.subr.mxu0 0.0
      %556 = vmatpush1.msra.mxu0 0.0
      %557 = vmatprep.subr.mxu0 0.0
      %558 = vmatpush1.msra.mxu0 0.0
      %559 = vmatprep.subr.mxu0 0.0
      %560 = vmatpush1.msra.mxu0 0.0
      %561 = vmatprep.subr.mxu0 0.0
      %562 = vmatpush1.msra.mxu0 0.0
      %563 = vmatprep.subr.mxu0 0.0
      %564 = vmatpush1.msra.mxu0 0.0
      %565 = vmatprep.subr.mxu0 0.0
      %566 = vmatpush1.msra.mxu0 0.0
      %567 = vmatprep.subr.mxu0 0.0
      %568 = vmatpush1.msra.mxu0 0.0
      %569 = vmatprep.subr.mxu0 0.0
      %570 = vmatpush1.msra.mxu0 0.0
      %571 = vmatprep.subr.mxu0 0.0
      %572 = vmatpush1.msra.mxu0 0.0
      %573 = vmatprep.subr.mxu0 0.0
      %574 = vmatpush1.msra.mxu0 0.0
      %575 = vmatprep.subr.mxu0 0.0
      %576 = vmatpush1.msra.mxu0 0.0
      %577 = vmatprep.subr.mxu0 0.0
      %578 = vmatpush1.msra.mxu0 0.0
      %579 = vmatprep.subr.mxu0 0.0
      %580 = vmatpush1.msra.mxu0 0.0
      %581 = vmatprep.subr.mxu0 0.0
      %582 = vmatpush1.msra.mxu0 0.0
      %583 = vmatprep.subr.mxu0 0.0
      %584 = vmatpush1.msra.mxu0 0.0
      %585 = vmatprep.subr.mxu0 0.0
      %586 = vmatpush1.msra.mxu0 0.0
      %587 = vmatprep.subr.mxu0 0.0
      %588 = vmatpush1.msra.mxu0 0.0
      %589 = vmatprep.subr.mxu0 0.0
      %590 = vmatpush1.msra.mxu0 0.0
      %591 = vmatprep.subr.mxu0 0.0
      %592 = vmatpush1.msra.mxu0 0.0
      %593 = vmatprep.subr.mxu0 0.0
      %594 = vmatpush1.msra.mxu0 0.0
      %595 = vmatprep.subr.mxu0 0.0
      %596 = vmatpush1.msra.mxu0 0.0
      %597 = vmatprep.subr.mxu0 0.0
      %598 = vmatpush1.msra.mxu0 0.0
      %599 = vmatprep.subr.mxu0 0.0
      %600 = vmatpush1.msra.mxu0 0.0
      %601 = vmatprep.subr.mxu0 0.0
      %602 = vmatpush1.msra.mxu0 0.0
      %603 = vmatprep.subr.mxu0 0.0
      %604 = vmatpush1.msra.mxu0 0.0
      %605 = vmatprep.subr.mxu0 0.0
      %606 = vmatpush1.msra.mxu0 0.0
      %607 = vmatprep.subr.mxu0 0.0
      %608 = vmatpush1.msra.mxu0 0.0
      %609 = vmatprep.subr.mxu0 0.0
      %610 = vmatpush1.msra.mxu0 0.0
      %611 = vmatprep.mubr.f32.mxu0 0.0
      %612 = vmatmul.mubr.f32.gmra.mrb[0].mxu0 %v466
      %v613 = vpop.f32.mrb[0].mxu0
      %v614 = vadd.f32 %v461, %v613
      %v615 = vpop.f32.mrb[0].mxu0
      %v616 = vadd.f32 %v463, %v615
      %617 = vdwg.mxu0
      %s618 = scalar_lea.vmem %s0, 16
      %v619 = vld [vmem:[%s618] sm:$0xff]
      %620 = vrot.lane.b32.xlu0 %v283, 93
      %v621 = vpop.permute.xlu0 %620
      %622 = vrot.lane.b32.xlu0 %v289, 93
      %v623 = vpop.permute.xlu0 %622
      %624 = vrot.lane.b32.xlu0 %v284, 93
      %v625 = vpop.permute.xlu0 %624
      %626 = vrot.lane.b32.xlu0 %v290, 93
      %v627 = vpop.permute.xlu0 %626
      %628 = vrot.lane.b32.xlu0 %v286, 93
      %v629 = vpop.permute.xlu0 %628
      %vm630 = vcmask 760832
      %v631 = vsel %vm630, %v621, %v623
      %v632 = vsel %vm630, %v623, %v625
      %v633 = vsel %vm630, %v625, %v627
      %v634 = vsel %vm630, %v627, %v629
      %v636 = vsel %vm310, %v619, 0
      %v638 = vsel %vm314, %v631, 0
      %v640 = vsel %vm314, %v632, 0
      %v642 = vsel %vm314, %v633, 0
      %v644 = vsel %vm314, %v634, 0
      %646 = vmatprep.subr.mxu0 %v640
      %647 = vmatpush1.msra.mxu0 %v638
      %648 = vmatprep.subr.mxu0 0.0
      %649 = vmatpush1.msra.mxu0 0.0
      %650 = vmatprep.subr.mxu0 0.0
      %651 = vmatpush1.msra.mxu0 0.0
      %652 = vmatprep.subr.mxu0 0.0
      %653 = vmatpush1.msra.mxu0 0.0
      %654 = vmatprep.subr.mxu0 0.0
      %655 = vmatpush1.msra.mxu0 0.0
      %656 = vmatprep.subr.mxu0 0.0
      %657 = vmatpush1.msra.mxu0 0.0
      %658 = vmatprep.subr.mxu0 0.0
      %659 = vmatpush1.msra.mxu0 0.0
      %660 = vmatprep.subr.mxu0 0.0
      %661 = vmatpush1.msra.mxu0 0.0
      %662 = vmatprep.subr.mxu0 0.0
      %663 = vmatpush1.msra.mxu0 0.0
      %664 = vmatprep.subr.mxu0 0.0
      %665 = vmatpush1.msra.mxu0 0.0
      %666 = vmatprep.subr.mxu0 0.0
      %667 = vmatpush1.msra.mxu0 0.0
      %668 = vmatprep.subr.mxu0 0.0
      %669 = vmatpush1.msra.mxu0 0.0
      %670 = vmatprep.subr.mxu0 0.0
      %671 = vmatpush1.msra.mxu0 0.0
      %672 = vmatprep.subr.mxu0 0.0
      %673 = vmatpush1.msra.mxu0 0.0
      %674 = vmatprep.subr.mxu0 0.0
      %675 = vmatpush1.msra.mxu0 0.0
      %676 = vmatprep.subr.mxu0 0.0
      %677 = vmatpush1.msra.mxu0 0.0
      %678 = vmatprep.subr.mxu0 0.0
      %679 = vmatpush1.msra.mxu0 0.0
      %680 = vmatprep.subr.mxu0 0.0
      %681 = vmatpush1.msra.mxu0 0.0
      %682 = vmatprep.subr.mxu0 0.0
      %683 = vmatpush1.msra.mxu0 0.0
      %684 = vmatprep.subr.mxu0 0.0
      %685 = vmatpush1.msra.mxu0 0.0
      %686 = vmatprep.subr.mxu0 0.0
      %687 = vmatpush1.msra.mxu0 0.0
      %688 = vmatprep.subr.mxu0 0.0
      %689 = vmatpush1.msra.mxu0 0.0
      %690 = vmatprep.subr.mxu0 0.0
      %691 = vmatpush1.msra.mxu0 0.0
      %692 = vmatprep.subr.mxu0 0.0
      %693 = vmatpush1.msra.mxu0 0.0
      %694 = vmatprep.subr.mxu0 0.0
      %695 = vmatpush1.msra.mxu0 0.0
      %696 = vmatprep.subr.mxu0 0.0
      %697 = vmatpush1.msra.mxu0 0.0
      %698 = vmatprep.subr.mxu0 0.0
      %699 = vmatpush1.msra.mxu0 0.0
      %700 = vmatprep.subr.mxu0 0.0
      %701 = vmatpush1.msra.mxu0 0.0
      %702 = vmatprep.subr.mxu0 0.0
      %703 = vmatpush1.msra.mxu0 0.0
      %704 = vmatprep.subr.mxu0 0.0
      %705 = vmatpush1.msra.mxu0 0.0
      %706 = vmatprep.subr.mxu0 0.0
      %707 = vmatpush1.msra.mxu0 0.0
      %708 = vmatprep.subr.mxu0 0.0
      %709 = vmatpush1.msra.mxu0 0.0
      %710 = vmatprep.mubr.f32.mxu0 0.0
      %711 = vmatmul.mubr.f32.gmra.mrb[0].mxu0 %v636
      %v712 = vpop.f32.mrb[0].mxu0
      %v713 = vadd.f32 0.0, %v712
      %v714 = vpop.f32.mrb[0].mxu0
      %v715 = vadd.f32 0.0, %v714
      %716 = vdwg.mxu0
      %717 = vmatprep.subr.mxu0 %v644
      %718 = vmatpush1.msra.mxu0 %v642
      %719 = vmatprep.subr.mxu0 0.0
      %720 = vmatpush1.msra.mxu0 0.0
      %721 = vmatprep.subr.mxu0 0.0
      %722 = vmatpush1.msra.mxu0 0.0
      %723 = vmatprep.subr.mxu0 0.0
      %724 = vmatpush1.msra.mxu0 0.0
      %725 = vmatprep.subr.mxu0 0.0
      %726 = vmatpush1.msra.mxu0 0.0
      %727 = vmatprep.subr.mxu0 0.0
      %728 = vmatpush1.msra.mxu0 0.0
      %729 = vmatprep.subr.mxu0 0.0
      %730 = vmatpush1.msra.mxu0 0.0
      %731 = vmatprep.subr.mxu0 0.0
      %732 = vmatpush1.msra.mxu0 0.0
      %733 = vmatprep.subr.mxu0 0.0
      %734 = vmatpush1.msra.mxu0 0.0
      %735 = vmatprep.subr.mxu0 0.0
      %736 = vmatpush1.msra.mxu0 0.0
      %737 = vmatprep.subr.mxu0 0.0
      %738 = vmatpush1.msra.mxu0 0.0
      %739 = vmatprep.subr.mxu0 0.0
      %740 = vmatpush1.msra.mxu0 0.0
      %741 = vmatprep.subr.mxu0 0.0
      %742 = vmatpush1.msra.mxu0 0.0
      %743 = vmatprep.subr.mxu0 0.0
      %744 = vmatpush1.msra.mxu0 0.0
      %745 = vmatprep.subr.mxu0 0.0
      %746 = vmatpush1.msra.mxu0 0.0
      %747 = vmatprep.subr.mxu0 0.0
      %748 = vmatpush1.msra.mxu0 0.0
      %749 = vmatprep.subr.mxu0 0.0
      %750 = vmatpush1.msra.mxu0 0.0
      %751 = vmatprep.subr.mxu0 0.0
      %752 = vmatpush1.msra.mxu0 0.0
      %753 = vmatprep.subr.mxu0 0.0
      %754 = vmatpush1.msra.mxu0 0.0
      %755 = vmatprep.subr.mxu0 0.0
      %756 = vmatpush1.msra.mxu0 0.0
      %757 = vmatprep.subr.mxu0 0.0
      %758 = vmatpush1.msra.mxu0 0.0
      %759 = vmatprep.subr.mxu0 0.0
      %760 = vmatpush1.msra.mxu0 0.0
      %761 = vmatprep.subr.mxu0 0.0
      %762 = vmatpush1.msra.mxu0 0.0
      %763 = vmatprep.subr.mxu0 0.0
      %764 = vmatpush1.msra.mxu0 0.0
      %765 = vmatprep.subr.mxu0 0.0
      %766 = vmatpush1.msra.mxu0 0.0
      %767 = vmatprep.subr.mxu0 0.0
      %768 = vmatpush1.msra.mxu0 0.0
      %769 = vmatprep.subr.mxu0 0.0
      %770 = vmatpush1.msra.mxu0 0.0
      %771 = vmatprep.subr.mxu0 0.0
      %772 = vmatpush1.msra.mxu0 0.0
      %773 = vmatprep.subr.mxu0 0.0
      %774 = vmatpush1.msra.mxu0 0.0
      %775 = vmatprep.subr.mxu0 0.0
      %776 = vmatpush1.msra.mxu0 0.0
      %777 = vmatprep.subr.mxu0 0.0
      %778 = vmatpush1.msra.mxu0 0.0
      %779 = vmatprep.subr.mxu0 0.0
      %780 = vmatpush1.msra.mxu0 0.0
      %781 = vmatprep.mubr.f32.mxu0 0.0
      %782 = vmatmul.mubr.f32.gmra.mrb[0].mxu0 %v636
      %v783 = vpop.f32.mrb[0].mxu0
      %v784 = vadd.f32 0.0, %v783
      %v785 = vpop.f32.mrb[0].mxu0
      %v786 = vadd.f32 0.0, %v785
      %787 = vdwg.mxu0
      %v788 = vadd.f32 %v543, %v713
      %v789 = vadd.f32 %v545, %v715
      %v790 = vadd.f32 %v614, %v784
      %v791 = vadd.f32 %v616, %v786
      %s792 = scalar_lea.vmem %s0, 24
      %v793 = vld [vmem:[%s792] sm:$0xff]
      %794 = vrot.lane.b32.xlu0 %v283, 92
      %v795 = vpop.permute.xlu0 %794
      %796 = vrot.lane.b32.xlu0 %v289, 92
      %v797 = vpop.permute.xlu0 %796
      %798 = vrot.lane.b32.xlu0 %v284, 92
      %v799 = vpop.permute.xlu0 %798
      %800 = vrot.lane.b32.xlu0 %v290, 92
      %v801 = vpop.permute.xlu0 %800
      %802 = vrot.lane.b32.xlu0 %v286, 92
      %v803 = vpop.permute.xlu0 %802
      %vm804 = vcmask 752640
      %v805 = vsel %vm804, %v795, %v797
      %v806 = vsel %vm804, %v797, %v799
      %v807 = vsel %vm804, %v799, %v801
      %v808 = vsel %vm804, %v801, %v803
      %v810 = vsel %vm310, %v793, 0
      %v812 = vsel %vm314, %v805, 0
      %v814 = vsel %vm314, %v806, 0
      %v816 = vsel %vm314, %v807, 0
      %v818 = vsel %vm314, %v808, 0
      %820 = vmatprep.subr.mxu0 %v814
      %821 = vmatpush1.msra.mxu0 %v812
      %822 = vmatprep.subr.mxu0 0.0
      %823 = vmatpush1.msra.mxu0 0.0
      %824 = vmatprep.subr.mxu0 0.0
      %825 = vmatpush1.msra.mxu0 0.0
      %826 = vmatprep.subr.mxu0 0.0
      %827 = vmatpush1.msra.mxu0 0.0
      %828 = vmatprep.subr.mxu0 0.0
      %829 = vmatpush1.msra.mxu0 0.0
      %830 = vmatprep.subr.mxu0 0.0
      %831 = vmatpush1.msra.mxu0 0.0
      %832 = vmatprep.subr.mxu0 0.0
      %833 = vmatpush1.msra.mxu0 0.0
      %834 = vmatprep.subr.mxu0 0.0
      %835 = vmatpush1.msra.mxu0 0.0
      %836 = vmatprep.subr.mxu0 0.0
      %837 = vmatpush1.msra.mxu0 0.0
      %838 = vmatprep.subr.mxu0 0.0
      %839 = vmatpush1.msra.mxu0 0.0
      %840 = vmatprep.subr.mxu0 0.0
      %841 = vmatpush1.msra.mxu0 0.0
      %842 = vmatprep.subr.mxu0 0.0
      %843 = vmatpush1.msra.mxu0 0.0
      %844 = vmatprep.subr.mxu0 0.0
      %845 = vmatpush1.msra.mxu0 0.0
      %846 = vmatprep.subr.mxu0 0.0
      %847 = vmatpush1.msra.mxu0 0.0
      %848 = vmatprep.subr.mxu0 0.0
      %849 = vmatpush1.msra.mxu0 0.0
      %850 = vmatprep.subr.mxu0 0.0
      %851 = vmatpush1.msra.mxu0 0.0
      %852 = vmatprep.subr.mxu0 0.0
      %853 = vmatpush1.msra.mxu0 0.0
      %854 = vmatprep.subr.mxu0 0.0
      %855 = vmatpush1.msra.mxu0 0.0
      %856 = vmatprep.subr.mxu0 0.0
      %857 = vmatpush1.msra.mxu0 0.0
      %858 = vmatprep.subr.mxu0 0.0
      %859 = vmatpush1.msra.mxu0 0.0
      %860 = vmatprep.subr.mxu0 0.0
      %861 = vmatpush1.msra.mxu0 0.0
      %862 = vmatprep.subr.mxu0 0.0
      %863 = vmatpush1.msra.mxu0 0.0
      %864 = vmatprep.subr.mxu0 0.0
      %865 = vmatpush1.msra.mxu0 0.0
      %866 = vmatprep.subr.mxu0 0.0
      %867 = vmatpush1.msra.mxu0 0.0
      %868 = vmatprep.subr.mxu0 0.0
      %869 = vmatpush1.msra.mxu0 0.0
      %870 = vmatprep.subr.mxu0 0.0
      %871 = vmatpush1.msra.mxu0 0.0
      %872 = vmatprep.subr.mxu0 0.0
      %873 = vmatpush1.msra.mxu0 0.0
      %874 = vmatprep.subr.mxu0 0.0
      %875 = vmatpush1.msra.mxu0 0.0
      %876 = vmatprep.subr.mxu0 0.0
      %877 = vmatpush1.msra.mxu0 0.0
      %878 = vmatprep.subr.mxu0 0.0
      %879 = vmatpush1.msra.mxu0 0.0
      %880 = vmatprep.subr.mxu0 0.0
      %881 = vmatpush1.msra.mxu0 0.0
      %882 = vmatprep.subr.mxu0 0.0
      %883 = vmatpush1.msra.mxu0 0.0
      %884 = vmatprep.mubr.f32.mxu0 0.0
      %885 = vmatmul.mubr.f32.gmra.mrb[0].mxu0 %v810
      %v886 = vpop.f32.mrb[0].mxu0
      %v887 = vadd.f32 0.0, %v886
      %v888 = vpop.f32.mrb[0].mxu0
      %v889 = vadd.f32 0.0, %v888
      %890 = vdwg.mxu0
      %891 = vmatprep.subr.mxu0 %v818
      %892 = vmatpush1.msra.mxu0 %v816
      %893 = vmatprep.subr.mxu0 0.0
      %894 = vmatpush1.msra.mxu0 0.0
      %895 = vmatprep.subr.mxu0 0.0
      %896 = vmatpush1.msra.mxu0 0.0
      %897 = vmatprep.subr.mxu0 0.0
      %898 = vmatpush1.msra.mxu0 0.0
      %899 = vmatprep.subr.mxu0 0.0
      %900 = vmatpush1.msra.mxu0 0.0
      %901 = vmatprep.subr.mxu0 0.0
      %902 = vmatpush1.msra.mxu0 0.0
      %903 = vmatprep.subr.mxu0 0.0
      %904 = vmatpush1.msra.mxu0 0.0
      %905 = vmatprep.subr.mxu0 0.0
      %906 = vmatpush1.msra.mxu0 0.0
      %907 = vmatprep.subr.mxu0 0.0
      %908 = vmatpush1.msra.mxu0 0.0
      %909 = vmatprep.subr.mxu0 0.0
      %910 = vmatpush1.msra.mxu0 0.0
      %911 = vmatprep.subr.mxu0 0.0
      %912 = vmatpush1.msra.mxu0 0.0
      %913 = vmatprep.subr.mxu0 0.0
      %914 = vmatpush1.msra.mxu0 0.0
      %915 = vmatprep.subr.mxu0 0.0
      %916 = vmatpush1.msra.mxu0 0.0
      %917 = vmatprep.subr.mxu0 0.0
      %918 = vmatpush1.msra.mxu0 0.0
      %919 = vmatprep.subr.mxu0 0.0
      %920 = vmatpush1.msra.mxu0 0.0
      %921 = vmatprep.subr.mxu0 0.0
      %922 = vmatpush1.msra.mxu0 0.0
      %923 = vmatprep.subr.mxu0 0.0
      %924 = vmatpush1.msra.mxu0 0.0
      %925 = vmatprep.subr.mxu0 0.0
      %926 = vmatpush1.msra.mxu0 0.0
      %927 = vmatprep.subr.mxu0 0.0
      %928 = vmatpush1.msra.mxu0 0.0
      %929 = vmatprep.subr.mxu0 0.0
      %930 = vmatpush1.msra.mxu0 0.0
      %931 = vmatprep.subr.mxu0 0.0
      %932 = vmatpush1.msra.mxu0 0.0
      %933 = vmatprep.subr.mxu0 0.0
      %934 = vmatpush1.msra.mxu0 0.0
      %935 = vmatprep.subr.mxu0 0.0
      %936 = vmatpush1.msra.mxu0 0.0
      %937 = vmatprep.subr.mxu0 0.0
      %938 = vmatpush1.msra.mxu0 0.0
      %939 = vmatprep.subr.mxu0 0.0
      %940 = vmatpush1.msra.mxu0 0.0
      %941 = vmatprep.subr.mxu0 0.0
      %942 = vmatpush1.msra.mxu0 0.0
      %943 = vmatprep.subr.mxu0 0.0
      %944 = vmatpush1.msra.mxu0 0.0
      %945 = vmatprep.subr.mxu0 0.0
      %946 = vmatpush1.msra.mxu0 0.0
      %947 = vmatprep.subr.mxu0 0.0
      %948 = vmatpush1.msra.mxu0 0.0
      %949 = vmatprep.subr.mxu0 0.0
      %950 = vmatpush1.msra.mxu0 0.0
      %951 = vmatprep.subr.mxu0 0.0
      %952 = vmatpush1.msra.mxu0 0.0
      %953 = vmatprep.subr.mxu0 0.0
      %954 = vmatpush1.msra.mxu0 0.0
      %955 = vmatprep.mubr.f32.mxu0 0.0
      %956 = vmatmul.mubr.f32.gmra.mrb[0].mxu0 %v810
      %v957 = vpop.f32.mrb[0].mxu0
      %v958 = vadd.f32 0.0, %v957
      %v959 = vpop.f32.mrb[0].mxu0
      %v960 = vadd.f32 0.0, %v959
      %961 = vdwg.mxu0
      %v962 = vadd.f32 %v788, %v887
      %v963 = vadd.f32 %v789, %v889
      %v964 = vadd.f32 %v790, %v958
      %v965 = vadd.f32 %v791, %v960
      %v966 = vld [vmem:[%s1] sm:$0xff]
      %968 = vset.pattern.permute.xlu0 0
      %969 = vperm.xlu0 %968, %v966
      %v970 = vpop.permute.xlu0 %969
      %v972 = vadd.f32 %v962, %v970
      %v973 = vadd.f32 %v963, %v970
      %v974 = vadd.f32 %v964, %v970
      %v975 = vadd.f32 %v965, %v970
      %v976 = vmax.f32 %v972, 0.0
      %v977 = vmax.f32 %v973, 0.0
      %v978 = vmax.f32 %v974, 0.0
      %v979 = vmax.f32 %v975, 0.0
      %980 = vst [vmem:[%s280] sm:$0xff] %v976
      %981 = vst [vmem:[%s280 + $0x8] sm:$0xff] %v977
      %982 = vst [vmem:[%s280 + $0x10] sm:$0xff] %v978
      %983 = vst [vmem:[%s280 + $0x18] sm:$0xff] %v979
      %s984 = smul.u32 4, %s20
      %p985 = scmp.lt.s32.totalorder %s19, 0
      %s986 = scalar_select %p985, %s19, 0
      %p987 = scmp.lt.s32.totalorder %s984, 19
      %s988 = scalar_select %p987, %s984, 19
      %s989 = smul.addr %s986, 20
      %s990 = sadd.s32 %s988, %s989
      %s991 = smul.addr %s990, 8
      %s992 = scalar_lea.vmem %s4, %s991
      // Predicated region
      $region37: #{conv_sub_relu.1} parent=35 // pred_check
        %p993 = pneg %p149
      $region38: #{conv_sub_relu.1} parent=35 // pred_check_branch
        %995 = sbr.rel (%p993) target = $region40
      $region39: #{conv_sub_relu.1} parent=35 // pred_region
        %s996 = smul.u32 4, %s20
      $region40: #{conv_sub_relu.1} parent=35 // pred_fallthru
        _
    $region36: #{conv_sub_relu.1} parent=5 // pred_fallthru
      _
    %p997 = scmp.le.s32.totalorder 2, %s10
    // Predicated region
    $region41: #{conv_sub_relu.1} parent=5 // pred_check
      %p998 = pneg %p997
    $region42: #{conv_sub_relu.1} parent=5 // pred_check_branch
      %1000 = sbr.rel (%p998) target = $region44
    $region43: #{conv_sub_relu.1} parent=5 // pred_region
      %s1001 = ssub.s32 %s10, 2
      // Predicated region
      $region45: #{conv_sub_relu.1} parent=43 // pred_check
        %p1002 = pneg %p155
      $region46: #{conv_sub_relu.1} parent=43 // pred_check_branch
        %1004 = sbr.rel (%p1002) target = $region48
      $region47: #{conv_sub_relu.1} parent=43 // pred_region
        %s1005 = smul.u32 4, %s22
        %p1006 = scmp.lt.s32.totalorder %s21, 0
        %s1007 = scalar_select %p1006, %s21, 0
        %p1008 = scmp.lt.s32.totalorder %s1005, 19
        %s1009 = scalar_select %p1008, %s1005, 19
        %s1010 = smul.addr %s1007, 20
        %s1011 = sadd.s32 %s1009, %s1010
        %s1012 = smul.addr %s1011, 8
        %s1013 = scalar_lea.vmem %s4, %s1012
      $region48: #{conv_sub_relu.1} parent=43 // pred_fallthru
        _
    $region44: #{conv_sub_relu.1} parent=5 // pred_fallthru
      _
  $region6: #{conv_sub_relu.1} parent=0 // loop_footer
    %s14 = sadd.s32 1, %s10
  $region7: #{conv_sub_relu.1} parent=0 // loop_footer_branch
    %9 = sbr.rel target = $region3
  $region8: #{conv_sub_relu.1} parent=0 // loop_exit
    _

</llo_original>
